<compile_context>
chip_gen: v5e
topology: v5e:2x2
jax: 0.10.0
libtpu: 0.0.40
codegen_flags: <defaults>
</compile_context>

<pallas_src>
import jax
import jax.numpy as jnp
from jax.experimental import pallas as pl
from jax.experimental.pallas import tpu as pltpu


def _round_up(n, m):
    return ((n + m - 1) // m) * m


def time2vec_kernel(scal_ref, x_ref, w_ref, p_vec_ref, out_ref):
    # scal_ref: SMEM (3,) = [w, p, R];  phi is pre-folded into p_vec_ref.
    x = x_ref[...]                                  # (TILE_B, Fp)
    w = scal_ref[0]
    p = scal_ref[1]
    r = scal_ref[2]
    fp = x.shape[-1]                                # static (lane-aligned)

    # Branch 1: scalar affine (VPU).
    original = w * x + p                            # (TILE_B, Fp)

    # Branch 2: matmul on the MXU (f32 acc) + single sine.
    z = jnp.dot(x, w_ref[...], preferred_element_type=jnp.float32)
    z = z + p_vec_ref[...]                          # bias (+ phi) broadcast over rows
    periodic = r * jnp.sin(z)                       # == sine_w*sin + cosine_w*cos

    # Lane-aligned stores of the two halves; no in-kernel concatenate.
    out_ref[:, :fp] = original.astype(out_ref.dtype)
    out_ref[:, fp:] = periodic.astype(out_ref.dtype)


def time2vec(x, W, P, w, p, sine_w, cosine_w, *, tile_b=256):
    """x: (B, F). Returns (B, 2F) matching the PyTorch Time2Vec forward."""
    B, F = x.shape
    f32 = jnp.float32

    # Lane/sublane-aligned padded shapes.
    Fp = _round_up(F, 128)
    Bp = _round_up(B, 8)
    tile_b = min(tile_b, Bp)
    Bp = _round_up(Bp, tile_b)

    # Amplitude/phase rewrite; fold the phase into the bias row.
    r = jnp.sqrt(sine_w.astype(f32) ** 2 + cosine_w.astype(f32) ** 2)
    phi = jnp.arctan2(cosine_w.astype(f32), sine_w.astype(f32))
    scalars = jnp.concatenate(
        [w.reshape(1), p.reshape(1), r.reshape(1)]
    ).astype(f32)                                   # (3,) -> SMEM

    # Zero-pad operands to aligned shapes (padding is sliced off below).
    x_p = x.astype(f32)
    if (Bp, Fp) != (B, F):
        x_p = jnp.zeros((Bp, Fp), f32).at[:B, :F].set(x_p)
    W_p = W.astype(f32)
    if Fp != F:
        W_p = jnp.zeros((Fp, Fp), f32).at[:F, :F].set(W_p)
    P_row = jnp.zeros((1, Fp), f32).at[0, :F].set(P.astype(f32)) + phi

    grid = (Bp // tile_b,)
    cost = pl.CostEstimate(
        flops=2 * Bp * Fp * Fp + 6 * Bp * Fp,
        transcendentals=Bp * Fp,
        bytes_accessed=4 * (Bp * Fp + Fp * Fp + Fp + Bp * 2 * Fp),
    )

    out = pl.pallas_call(
        time2vec_kernel,
        out_shape=jax.ShapeDtypeStruct((Bp, 2 * Fp), jnp.float32),
        grid=grid,
        in_specs=[
            pl.BlockSpec(memory_space=pltpu.MemorySpace.SMEM),   # [w, p, R]
            pl.BlockSpec((tile_b, Fp), lambda i: (i, 0)),        # x tile
            pl.BlockSpec((Fp, Fp), lambda i: (0, 0)),            # W (resident)
            pl.BlockSpec((1, Fp), lambda i: (0, 0)),             # bias row (+phi)
        ],
        out_specs=pl.BlockSpec((tile_b, 2 * Fp), lambda i: (i, 0)),
        compiler_params=pltpu.CompilerParams(
            dimension_semantics=("parallel",),
        ),
        cost_estimate=cost,
    )(scalars, x_p, W_p, P_row)

    if (Bp, Fp) == (B, F):
        return out.astype(x.dtype)
    # Strip padding: take the first F cols of each half.
    return jnp.concatenate(
        [out[:B, :F], out[:B, Fp:Fp + F]], axis=-1
    ).astype(x.dtype)


def time2vec_ref(x, W, P, w, p, sine_w, cosine_w):
    original = w * x + p
    z = x @ W + P
    periodic = sine_w * jnp.sin(z) + cosine_w * jnp.cos(z)
    return jnp.concatenate([original, periodic], axis=-1)


if __name__ == "__main__":
    B, F = 8, 32  # batch, in_features

    key = jax.random.PRNGKey(0)
    kx, kW, kP, kw, kp, ks, kc = jax.random.split(key, 7)

    x = jax.random.normal(kx, (B, F), dtype=jnp.float32)
    # Deterministic synthetic parameters (shapes per the module __init__).
    W = jax.random.normal(kW, (F, F), dtype=jnp.float32)
    P = jax.random.normal(kP, (F,), dtype=jnp.float32)
    w = jax.random.normal(kw, (1,), dtype=jnp.float32)
    p = jax.random.normal(kp, (1,), dtype=jnp.float32)
    sine_w = jax.random.normal(ks, (1,), dtype=jnp.float32)
    cosine_w = jax.random.normal(kc, (1,), dtype=jnp.float32)

    out = time2vec(x, W, P, w, p, sine_w, cosine_w)
    out = jax.block_until_ready(out)

    ref = time2vec_ref(x, W, P, w, p, sine_w, cosine_w)
    assert out.shape == (B, 2 * F)
    assert jnp.allclose(out, ref, atol=1e-5, rtol=1e-5)

    print("KERNEL_OK")
</pallas_src>

<mosaic_0001>
module attributes {stable_mosaic.version = 11 : i64} {
  func.func @time2vec_kernel(%arg0: i32, %arg1: memref<3xf32, #tpu.memory_space<smem>>, %arg2: memref<8x128xf32, #tpu.memory_space<vmem>>, %arg3: memref<128x128xf32, #tpu.memory_space<vmem>>, %arg4: memref<1x128xf32, #tpu.memory_space<vmem>>, %arg5: memref<8x256xf32, #tpu.memory_space<vmem>>) attributes {dimension_semantics = [#tpu.dimension_semantics<parallel>], iteration_bounds = array<i64: 1>, scalar_prefetch = 0 : i64, scratch_operands = 0 : i64, tpu.core_type = #tpu.core_type<tc>, window_params = [{transform_indices = @transform_0, window_bounds = array<i64: 3>}, {transform_indices = @transform_1, window_bounds = array<i64: 8, 128>}, {pipeline_mode = #tpu.pipeline_mode<synchronous>, transform_indices = @transform_2, window_bounds = array<i64: 128, 128>}, {pipeline_mode = #tpu.pipeline_mode<synchronous>, transform_indices = @transform_3, window_bounds = array<i64: 1, 128>}, {transform_indices = @transform_4, window_bounds = array<i64: 8, 256>}]} {
    %c0 = arith.constant 0 : index
    %c0_0 = arith.constant 0 : index
    %0 = vector.load %arg2[%c0, %c0_0] : memref<8x128xf32, #tpu.memory_space<vmem>>, vector<8x128xf32>
    %c0_1 = arith.constant 0 : index
    %1 = memref.load %arg1[%c0_1] : memref<3xf32, #tpu.memory_space<smem>>
    %c1 = arith.constant 1 : index
    %2 = memref.load %arg1[%c1] : memref<3xf32, #tpu.memory_space<smem>>
    %c2 = arith.constant 2 : index
    %3 = memref.load %arg1[%c2] : memref<3xf32, #tpu.memory_space<smem>>
    %4 = vector.broadcast %1 : f32 to vector<8x128xf32>
    %5 = arith.mulf %4, %0 : vector<8x128xf32>
    %6 = vector.broadcast %2 : f32 to vector<8x128xf32>
    %7 = arith.addf %5, %6 : vector<8x128xf32>
    %c0_2 = arith.constant 0 : index
    %c0_3 = arith.constant 0 : index
    %8 = vector.load %arg3[%c0_2, %c0_3] : memref<128x128xf32, #tpu.memory_space<vmem>>, vector<128x128xf32>
    %cst = arith.constant dense<0.000000e+00> : vector<8x128xf32>
    %9 = tpu.matmul %0, %8, %cst {dimension_numbers = #tpu.dot_dimension_numbers<[1], [0], [0], [1], [0, 0, 1, 1], [], []>} : vector<8x128xf32>, vector<128x128xf32>, vector<8x128xf32> -> vector<8x128xf32>
    %c0_4 = arith.constant 0 : index
    %c0_5 = arith.constant 0 : index
    %10 = vector.load %arg4[%c0_4, %c0_5] : memref<1x128xf32, #tpu.memory_space<vmem>>, vector<1x128xf32>
    %11 = vector.broadcast %10 : vector<1x128xf32> to vector<8x128xf32>
    %12 = arith.addf %9, %11 : vector<8x128xf32>
    %13 = math.sin %12 : vector<8x128xf32>
    %14 = vector.broadcast %3 : f32 to vector<8x128xf32>
    %15 = arith.mulf %14, %13 : vector<8x128xf32>
    %c0_6 = arith.constant 0 : index
    %c0_7 = arith.constant 0 : index
    %16 = vector.load %arg5[%c0_6, %c0_7] : memref<8x256xf32, #tpu.memory_space<vmem>>, vector<8x128xf32>
    tpu.vector_store %arg5[%c0_6, %c0_7], %7 {strides = array<i32>} : memref<8x256xf32, #tpu.memory_space<vmem>>, vector<8x128xf32>,
    %c0_8 = arith.constant 0 : index
    %c128 = arith.constant 128 : index
    %17 = vector.load %arg5[%c0_8, %c128] : memref<8x256xf32, #tpu.memory_space<vmem>>, vector<8x128xf32>
    tpu.vector_store %arg5[%c0_8, %c128], %15 {strides = array<i32>} : memref<8x256xf32, #tpu.memory_space<vmem>>, vector<8x128xf32>,
    return
  }
  func.func @transform_0(%arg0: i32) -> i32 {
    %c0_i32 = arith.constant 0 : i32
    %c0_i32_0 = arith.constant 0 : i32
    return %c0_i32 : i32
  }
  func.func @transform_1(%arg0: i32) -> (i32, i32) {
    %c0_i32 = arith.constant 0 : i32
    %c0_i32_0 = arith.constant 0 : i32
    return %arg0, %c0_i32 : i32, i32
  }
  func.func @transform_2(%arg0: i32) -> (i32, i32) {
    %c0_i32 = arith.constant 0 : i32
    %c0_i32_0 = arith.constant 0 : i32
    %c0_i32_1 = arith.constant 0 : i32
    return %c0_i32, %c0_i32_0 : i32, i32
  }
  func.func @transform_3(%arg0: i32) -> (i32, i32) {
    %c0_i32 = arith.constant 0 : i32
    %c0_i32_0 = arith.constant 0 : i32
    %c0_i32_1 = arith.constant 0 : i32
    return %c0_i32, %c0_i32_0 : i32, i32
  }
  func.func @transform_4(%arg0: i32) -> (i32, i32) {
    %c0_i32 = arith.constant 0 : i32
    %c0_i32_0 = arith.constant 0 : i32
    return %arg0, %c0_i32 : i32, i32
  }
}

</mosaic_0001>

<llo_original>
// kernel: tpu_custom_call.1
$region0: #{tpu_custom_call.1}
  #allocation0 [shape = 'u32[]', space=smem, size = 0x4, offset = 0x4, fixed_abs, tag = 'smem constant byte address 0x4 - core index']
  #allocation1 [shape = 'u32[72,128]{1,0:T(1,128)}', space=vmem, size = 0x9000, scoped, tag = 'internal scratch']
  %s0 = inlined_call_operand.hbm [shape: f32[3], index: 0, kind: input, shape index: {}]
  %s1 = inlined_call_operand.hbm [shape: f32[8,128], index: 1, kind: input, shape index: {}]
  %s2 = inlined_call_operand.hbm [shape: f32[128,128], index: 2, kind: input, shape index: {}]
  %s3 = inlined_call_operand.vmem [shape: f32[1,128], index: 3, kind: input, shape index: {}]
  %s4 = inlined_call_operand.hbm [shape: f32[8,256], index: 4, kind: output, shape index: {}]
  %s5 = sld [smem:[#allocation0]]
  $region38: #{tpu_custom_call.1} parent=0
    _
  %s7 = ssub.s32 1, %s5
  %s8 = scalar_select 0, %s7, %s5
  $region1: #{tpu_custom_call.1} parent=0
    #allocation2 [shape = 'u8[512]{0}', space=smem, size = 0x200, scoped, tag = 'input window, operand 0, single buffered']
    #allocation3 [shape = 's32[1]{0}', space=sflag, size = 0x4, scoped, tag = 'scoped memory for tpu_custom_call.1']
    #allocation4 [shape = 's32[1]{0}', space=sflag, size = 0x4, scoped, tag = 'scoped memory for tpu_custom_call.1']
    #allocation5 [shape = 's32[1]{0}', space=sflag, size = 0x4, scoped, tag = 'scoped memory for tpu_custom_call.1']
    #allocation6 [shape = 'u8[4096]{0}', space=vmem, size = 0x1000, scoped, tag = 'input window, operand 1, single buffered']
    #allocation7 [shape = 'u8[65536]{0}', space=vmem, size = 0x10000, scoped, tag = 'input window, operand 2, single buffered']
    #allocation8 [shape = 's32[1]{0}', space=sflag, size = 0x4, scoped, tag = 'scoped memory for tpu_custom_call.1']
    #allocation9 [shape = 'u8[8192]{0}', space=vmem, size = 0x2000, scoped, tag = 'output window, operand 0, single buffered']
    %9 = vsyncpa [#allocation5], 0
    %10 = vsyncpa [#allocation3], 0
    %11 = vsyncpa [#allocation8], 0
    %12 = vsyncpa [#allocation4], 0
    // Predicated region
    $region2: #{tpu_custom_call.1} parent=1 // pred_check
      _
    $region3: #{tpu_custom_call.1} parent=1 // pred_check_branch
      %14 = sbr.rel (0) target = $region5
    $region4: #{tpu_custom_call.1} parent=1 // pred_region
      %16 = vsyncadd [#allocation5], 0
      %s18 = sshll.u32 %s0, 4
      %s19 = int_to_ptr.hbm [resolvable:$true] %s18
      %21 = dma.hbm_to_smem %s19, 16, [#allocation2], [#allocation5]
    $region5: #{tpu_custom_call.1} parent=1 // pred_fallthru
      _
    // Predicated region
    $region6: #{tpu_custom_call.1} parent=1 // pred_check
      _
    $region7: #{tpu_custom_call.1} parent=1 // pred_check_branch
      %23 = sbr.rel (0) target = $region9
    $region8: #{tpu_custom_call.1} parent=1 // pred_region
      %25 = vsyncadd [#allocation3], 0
      %s27 = sshll.u32 %s1, 4
      %s28 = int_to_ptr.hbm [resolvable:$true] %s27
      %s29 = sshll.u32 [#allocation6], 4
      %s30 = int_to_ptr.vmem [resolvable:$true] %s29
      %32 = dma.hbm_to_vmem [thread:$0]  %s28, 128, %s30, [#allocation3]
    $region9: #{tpu_custom_call.1} parent=1 // pred_fallthru
      _
    // Predicated region
    $region10: #{tpu_custom_call.1} parent=1 // pred_check
      _
    $region11: #{tpu_custom_call.1} parent=1 // pred_check_branch
      %34 = sbr.rel (0) target = $region13
    $region12: #{tpu_custom_call.1} parent=1 // pred_region
      %36 = vsyncadd [#allocation8], 0
      %s37 = sshll.u32 %s2, 4
      %s38 = int_to_ptr.hbm [resolvable:$true] %s37
      %s39 = sshll.u32 [#allocation7], 4
      %s40 = int_to_ptr.vmem [resolvable:$true] %s39
      %45 = dma.hbm_to_vmem [thread:$0]  %s38, 2048, %s40, [#allocation8], 128, 128, 8
    $region13: #{tpu_custom_call.1} parent=1 // pred_fallthru
      _
    // Predicated region
    $region14: #{tpu_custom_call.1} parent=1 // pred_check
      _
    $region15: #{tpu_custom_call.1} parent=1 // pred_check_branch
      %47 = sbr.rel (0) target = $region17
    $region16: #{tpu_custom_call.1} parent=1 // pred_region
      _
    $region17: #{tpu_custom_call.1} parent=1 // pred_fallthru
      _
    // Predicated region
    $region18: #{tpu_custom_call.1} parent=1 // pred_check
      _
    $region19: #{tpu_custom_call.1} parent=1 // pred_check_branch
      %49 = sbr.rel (0) target = $region21
    $region20: #{tpu_custom_call.1} parent=1 // pred_region
      %51 = dma.done [#allocation5], 16
    $region21: #{tpu_custom_call.1} parent=1 // pred_fallthru
      _
    // Predicated region
    $region22: #{tpu_custom_call.1} parent=1 // pred_check
      _
    $region23: #{tpu_custom_call.1} parent=1 // pred_check_branch
      %53 = sbr.rel (0) target = $region25
    $region24: #{tpu_custom_call.1} parent=1 // pred_region
      %55 = dma.done [#allocation3], 128
    $region25: #{tpu_custom_call.1} parent=1 // pred_fallthru
      _
    // Predicated region
    $region26: #{tpu_custom_call.1} parent=1 // pred_check
      _
    $region27: #{tpu_custom_call.1} parent=1 // pred_check_branch
      %57 = sbr.rel (0) target = $region29
    $region28: #{tpu_custom_call.1} parent=1 // pred_region
      %59 = dma.done [#allocation8], 2048
    $region29: #{tpu_custom_call.1} parent=1 // pred_fallthru
      _
    %60 = sfence
    %v61 = vld [vmem:[#allocation6] sm:$0xff]
    %s62 = sld [smem:[#allocation2]]
    %s63 = sld [smem:[#allocation2 + $0x1]]
    %s64 = sld [smem:[#allocation2 + $0x2]]
    %v65 = vstv %s62
    %v66 = vmul.f32 %v65, %v61
    %v67 = vstv %s63
    %v68 = vadd.f32 %v66, %v67
    %v69 = vld [vmem:[#allocation7] sm:$0xff]
    %v70 = vld [vmem:[#allocation7 + $0x8] sm:$0xff]
    %v71 = vld [vmem:[#allocation7 + $0x10] sm:$0xff]
    %v72 = vld [vmem:[#allocation7 + $0x18] sm:$0xff]
    %v73 = vld [vmem:[#allocation7 + $0x20] sm:$0xff]
    %v74 = vld [vmem:[#allocation7 + $0x28] sm:$0xff]
    %v75 = vld [vmem:[#allocation7 + $0x30] sm:$0xff]
    %v76 = vld [vmem:[#allocation7 + $0x38] sm:$0xff]
    %v77 = vld [vmem:[#allocation7 + $0x40] sm:$0xff]
    %v78 = vld [vmem:[#allocation7 + $0x48] sm:$0xff]
    %v79 = vld [vmem:[#allocation7 + $0x50] sm:$0xff]
    %v80 = vld [vmem:[#allocation7 + $0x58] sm:$0xff]
    %v81 = vld [vmem:[#allocation7 + $0x60] sm:$0xff]
    %v82 = vld [vmem:[#allocation7 + $0x68] sm:$0xff]
    %v83 = vld [vmem:[#allocation7 + $0x70] sm:$0xff]
    %v84 = vld [vmem:[#allocation7 + $0x78] sm:$0xff]
    %v85 = vld [vmem:[%s3] sm:$0x1]
    %v87 = vperm.slane %v85, 0
    %89 = vmatpush.msra.mxu0 %v84
    %90 = vmatpush.msra.mxu0 %v83
    %91 = vmatpush.msra.mxu0 %v82
    %92 = vmatpush.msra.mxu0 %v81
    %93 = vmatpush.msra.mxu0 %v80
    %94 = vmatpush.msra.mxu0 %v79
    %95 = vmatpush.msra.mxu0 %v78
    %96 = vmatpush.msra.mxu0 %v77
    %97 = vmatpush.msra.mxu0 %v76
    %98 = vmatpush.msra.mxu0 %v75
    %99 = vmatpush.msra.mxu0 %v74
    %100 = vmatpush.msra.mxu0 %v73
    %101 = vmatpush.msra.mxu0 %v72
    %102 = vmatpush.msra.mxu0 %v71
    %103 = vmatpush.msra.mxu0 %v70
    %104 = vmatpush.msra.mxu0 %v69
    %105 = vmatmul.f32.gmra.mxu0 %v61
    %v106 = vpop.f32.mrf.mxu0
    %v107 = vadd.f32 %v87, %v106
    %108 = vdwg.mxu0
    %v109 = vand.u32 2147483647, %v107
    %vm110 = vcmp.le.f32.partialorder %v109, 0.7853982
    %vm111 = vcmp.lt.s32.totalorder %v107, 0
    %v112 = vand.u32 %v107, 2139095040
    %v113 = vshrl.u32 %v112, 23
    %v114 = vsub.s32 %v113, 127
    %v115 = vand.u32 2147483647, %v107
    %v116 = vand.u32 %v115, 8388607
    %v117 = vor.u32 %v116, 8388608
    %v118 = vsub.s32 0, %v117
    %v119 = vadd.s32 %v114, 1
    %vm120 = vcmp.gt.s32.totalorder %v119, 0
    %v121 = vsel %vm120, %v119, 0
    %v122 = vshrl.u32 %v121, 5
    %v123 = vand.u32 %v121, 31
    %v124 = vsub.s32 32, %v123
    %v125 = vshrl.u32 683565275, %v124
    %v126 = vshll.u32 683565275, %v123
    %v127 = vshrl.u32 2475754826, %v124
    %v128 = vor.u32 %v126, %v127
    %v129 = vshll.u32 2475754826, %v123
    %v130 = vshrl.u32 2131351028, %v124
    %v131 = vor.u32 %v129, %v130
    %v132 = vshll.u32 2131351028, %v123
    %v133 = vshrl.u32 2102212464, %v124
    %v134 = vor.u32 %v132, %v133
    %v135 = vshll.u32 2102212464, %v123
    %v136 = vshrl.u32 920167782, %v124
    %v137 = vor.u32 %v135, %v136
    %v138 = vshll.u32 920167782, %v123
    %v139 = vshrl.u32 1326507024, %v124
    %v140 = vor.u32 %v138, %v139
    %vm141 = vcmp.lt.s32.totalorder %v122, 1
    %vm142 = vcmp.lt.s32.totalorder %v122, 2
    %vm143 = vcmp.lt.s32.totalorder %v122, 3
    %vm144 = vcmp.lt.s32.totalorder %v122, 4
    %v145 = vsel %vm141, %v125, %v128
    %v146 = vsel %vm144, %v134, 2102212464
    %v147 = vsel %vm143, %v131, %v146
    %v148 = vsel %vm142, %v145, %v147
    %v149 = vsel %vm141, %v128, %v131
    %v150 = vsel %vm144, %v137, 920167782
    %v151 = vsel %vm143, %v134, %v150
    %v152 = vsel %vm142, %v149, %v151
    %v153 = vsel %vm141, %v131, %v134
    %v154 = vsel %vm144, %v140, 1326507024
    %v155 = vsel %vm143, %v137, %v154
    %v156 = vsel %vm142, %v153, %v155
    %v157 = vshll.u32 %v117, 8
    %v158 = vand.u32 %v157, 65535
    %v159 = vshrl.u32 %v157, 16
    %v160 = vand.u32 %v156, 65535
    %v161 = vshrl.u32 %v156, 16
    %v162 = vmul.u32 %v158, %v160
    %v163 = vmul.u32 %v158, %v161
    %v164 = vmul.u32 %v159, %v160
    %v165 = vmul.u32 %v159, %v161
    %v166 = vshll.u32 %v163, 16
    %v167 = vshrl.u32 %v163, 16
    %v168 = vshll.u32 %v164, 16
    %v169 = vshrl.u32 %v164, 16
    %vm170 = vc.u32 %v162, %v166
    %v171 = vsel %vm170, 1, 0
    %v172 = vadd.s32 %v162, %v166
    %v173 = vadd.s32 %v165, %v171
    %vm174 = vc.u32 %v172, %v168
    %v175 = vsel %vm174, 1, 0
    %v176 = vadd.s32 %v172, %v168
    %v177 = vadd.s32 %v173, %v175
    %v178 = vadd.s32 %v177, %v167
    %v179 = vadd.s32 %v178, %v169
    %v180 = vand.u32 %v157, 65535
    %v181 = vshrl.u32 %v157, 16
    %v182 = vand.u32 %v152, 65535
    %v183 = vshrl.u32 %v152, 16
    %v184 = vmul.u32 %v180, %v182
    %v185 = vmul.u32 %v180, %v183
    %v186 = vmul.u32 %v181, %v182
    %v187 = vmul.u32 %v181, %v183
    %v188 = vshll.u32 %v185, 16
    %v189 = vshrl.u32 %v185, 16
    %v190 = vshll.u32 %v186, 16
    %v191 = vshrl.u32 %v186, 16
    %vm192 = vc.u32 %v184, %v188
    %v193 = vsel %vm192, 1, 0
    %v194 = vadd.s32 %v184, %v188
    %v195 = vadd.s32 %v187, %v193
    %vm196 = vc.u32 %v194, %v190
    %v197 = vsel %vm196, 1, 0
    %v198 = vadd.s32 %v194, %v190
    %v199 = vadd.s32 %v195, %v197
    %v200 = vadd.s32 %v199, %v189
    %v201 = vadd.s32 %v200, %v191
    %v202 = vmul.u32 %v157, %v148
    %v203 = vadd.s32 %v179, %v198
    %vm204 = vc.u32 %v179, %v198
    %v205 = vadd.s32 %v201, 1
    %v206 = vsel %vm204, %v205, %v201
    %v207 = vadd.s32 %v202, %v206
    %v208 = vadd.s32 %v207, 536870912
    %v209 = vshrl.u32 %v208, 30
    %v210 = vshll.u32 %v209, 30
    %v211 = vsub.s32 %v207, %v210
    %vm212 = vcmp.lt.s32.totalorder %v211, 0
    %v213 = vsub.s32 0, %v211
    %v214 = vsel %vm212, %v213, %v211
    %v215 = vclz %v214
    %v216 = vsub.s32 %v215, 2
    %vm217 = vcmp.gt.s32.totalorder 0, %v216
    %v218 = vsel %vm217, 0, %v216
    %v219 = vsub.s32 32, %v218
    %v220 = vshll.u32 %v211, %v218
    %v221 = vshrl.u32 %v203, %v219
    %v222 = vor.u32 %v220, %v221
    %v223 = vsub.s32 4294967266, %v218
    %v224 = vadd.s32 %v223, 127
    %v225 = vshll.u32 %v224, 23
    %v226 = vor.u32 4788187, %v225
    %v227 = vand.u32 2147483647, %v226
    %v229 = vcvt.s32.f32 %v222
    %v230 = vmul.f32 %v229, %v227
    %v231 = vxor.u32 %v230, 2147483648
    %v232 = vsel %vm111, %v231, %v230
    %v233 = vsub.s32 4, %v209
    %v234 = vsel %vm111, %v233, %v209
    %v235 = vsel %vm110, %v107, %v232
    %v236 = vsel %vm110, 0, %v234
    %v237 = vmul.f32 %v235, %v235
    %v238 = vmul.f32 %v237, -0.001358992
    %v239 = vadd.f32 %v238, 0.041655596
    %v240 = vmul.f32 %v237, %v239
    %v241 = vadd.f32 %v240, -0.4999988
    %v242 = vmul.f32 %v237, %v241
    %v243 = vadd.f32 1.0, %v242
    %v244 = vmul.f32 %v235, %v235
    %v245 = vmul.f32 %v244, -0.00019511016
    %v246 = vadd.f32 %v245, 0.008332121
    %v247 = vmul.f32 %v244, %v246
    %v248 = vadd.f32 %v247, -0.16666654
    %v249 = vmul.f32 %v244, %v248
    %v250 = vadd.f32 %v249, 1.0
    %v251 = vmul.f32 %v250, %v235
    %vm252 = vweird.f32 %v107
    %v253 = vadd.s32 %v236, 3
    %v254 = vand.u32 %v253, 3
    %vm255 = vcmp.lt.s32.totalorder %v254, 2
    %vm256 = vcmp.eq.s32.totalorder %v254, 0
    %v257 = vxor.u32 %v251, 2147483648
    %v258 = vsel %vm256, %v243, %v257
    %vm259 = vcmp.eq.s32.totalorder %v254, 2
    %v260 = vxor.u32 %v243, 2147483648
    %v261 = vsel %vm259, %v260, %v251
    %v262 = vsel %vm255, %v258, %v261
    %v263 = vsel %vm252, nan, %v262
    %v264 = vstv %s64
    %v265 = vmul.f32 %v264, %v263
    %266 = vst [vmem:[#allocation9] sm:$0xff] %v68
    %267 = vst [vmem:[#allocation9 + $0x8] sm:$0xff] %v265
    // Predicated region
    $region30: #{tpu_custom_call.1} parent=1 // pred_check
      _
    $region31: #{tpu_custom_call.1} parent=1 // pred_check_branch
      %269 = sbr.rel (0) target = $region33
    $region32: #{tpu_custom_call.1} parent=1 // pred_region
      %271 = vsyncadd [#allocation4], 0
      %s273 = sshll.u32 [#allocation9], 4
      %s274 = int_to_ptr.vmem [resolvable:$true] %s273
      %s275 = sshll.u32 %s4, 4
      %s276 = int_to_ptr.hbm [resolvable:$true] %s275
      %278 = dma.vmem_to_hbm [thread:$0]  %s274, 256, %s276, [#allocation4]
    $region33: #{tpu_custom_call.1} parent=1 // pred_fallthru
      _
    // Predicated region
    $region34: #{tpu_custom_call.1} parent=1 // pred_check
      _
    $region35: #{tpu_custom_call.1} parent=1 // pred_check_branch
      %280 = sbr.rel (0) target = $region37
    $region36: #{tpu_custom_call.1} parent=1 // pred_region
      %282 = dma.done [#allocation4], 256
    $region37: #{tpu_custom_call.1} parent=1 // pred_fallthru
      _
    %283 = vsyncpa [#allocation3], 1
    %284 = vsyncpa [#allocation8], 1
    %285 = vsyncpa [#allocation4], 1
    %286 = vsyncpa [#allocation5], 1

</llo_original>
